<compile_context>
chip_gen: v7x
topology: tpu7x:2x2x1
jax: 0.10.0
libtpu: 0.0.40
codegen_flags: <defaults>
</compile_context>

<pallas_src>
import jax
import jax.numpy as jnp
from jax.experimental import pallas as pl
from jax.experimental.pallas import tpu as pltpu


def _round_up(n: int, m: int) -> int:
    return ((n + m - 1) // m) * m


def _spec(shape, index_map, *, single_buffer=False):
    """BlockSpec helper; requests single-buffering for grid-resident operands."""
    if single_buffer:
        try:
            return pl.BlockSpec(shape, index_map, pipeline_mode=pl.Buffered(1))
        except (AttributeError, TypeError):
            pass
    return pl.BlockSpec(shape, index_map)


def _make_ffn_kernel(apply_dropout: bool):
    def kernel(x_ref, w1_ref, b1_ref, w2_ref, b2_ref, *rest):
        if apply_dropout:
            mask_ref, o_ref, acc_ref = rest
        else:
            o_ref, acc_ref = rest
            mask_ref = None

        k = pl.program_id(1)

        @pl.when(k == 0)
        def _init():
            acc_ref[...] = jnp.zeros_like(acc_ref)

        # linear1 slab + bias + ReLU, f32 accumulation on the MXU.
        h = jnp.dot(x_ref[...], w1_ref[...], preferred_element_type=jnp.float32)
        h = jnp.maximum(h + b1_ref[...].astype(jnp.float32), 0.0)

        if apply_dropout:
            # Pre-scaled keep mask (0 or 1/(1-p)); plain VPU multiply.
            h = h * mask_ref[...].astype(jnp.float32)

        # Feed the second matmul a narrow LHS when weights are sub-f32 (keeps
        # the MXU at its bf16 rate and halves the h-tile footprint).
        lhs = h if w2_ref.dtype == jnp.float32 else h.astype(w2_ref.dtype)
        acc_ref[...] += jnp.dot(lhs, w2_ref[...], preferred_element_type=jnp.float32)

        @pl.when(k == pl.num_programs(1) - 1)
        def _finalize():
            o_ref[...] = (acc_ref[...] + b2_ref[...].astype(jnp.float32)).astype(o_ref.dtype)

    return kernel


def _choose_tile_h(d_model: int, hidden: int, w_itemsize: int, budget_bytes: int) -> int:
    """Largest hidden slab (multiple of 128, dividing hidden) fitting the weight budget."""
    resident_bytes = 2 * d_model * hidden * w_itemsize  # W1 + W2 single-buffered
    if resident_bytes <= budget_bytes or hidden % 128 != 0:
        return hidden
    for th in range(hidden - 128, 0, -128):
        # double-buffered slabs when streaming
        if hidden % th == 0 and 2 * (2 * d_model * th * w_itemsize) <= budget_bytes:
            return th
    return 128


def positionwise_feed_forward(
    x: jax.Array,
    w1: jax.Array,   # (d_model, hidden)
    b1: jax.Array,   # (hidden,)
    w2: jax.Array,   # (hidden, d_model)
    b2: jax.Array,   # (d_model,)
    *,
    drop_prob: float = 0.1,
    training: bool = False,
    rng_key=None,
    tile_m: int = 256,
    vmem_weight_budget: int = 40 << 20,
) -> jax.Array:
    """Pallas equivalent of PositionwiseFeedForward(d_model, hidden).forward(x)."""
    orig_shape = x.shape
    d_model, hidden = w1.shape
    assert orig_shape[-1] == d_model
    assert w2.shape == (hidden, d_model)
    assert b1.shape == (hidden,) and b2.shape == (d_model,)

    apply_dropout = bool(training) and float(drop_prob) > 0.0

    # Flatten leading dims into a single row axis.
    x2 = x.reshape(-1, d_model)
    m = x2.shape[0]

    # Row tile: big enough to fill the MXU and amortize per-step overhead,
    # but never larger than (sublane-padded) M itself.
    tm = tile_m if m >= tile_m else _round_up(m, 8)
    m_pad = _round_up(m, tm)
    padded = m_pad != m
    if padded:
        x2 = jnp.pad(x2, ((0, m_pad - m), (0, 0)))

    # Hidden slab: fully resident weights when they fit, else K-tile hidden.
    th = _choose_tile_h(d_model, hidden, w1.dtype.itemsize, vmem_weight_budget)
    h_tiles = hidden // th
    weights_resident = h_tiles == 1
    grid = (m_pad // tm, h_tiles)

    b1_2d = b1.reshape(1, hidden)
    b2_2d = b2.reshape(1, d_model)

    in_specs = [
        pl.BlockSpec((tm, d_model), lambda i, k: (i, 0)),                            # x rows
        _spec((d_model, th), lambda i, k: (0, k), single_buffer=weights_resident),   # W1
        _spec((1, th), lambda i, k: (0, k), single_buffer=weights_resident),         # b1
        _spec((th, d_model), lambda i, k: (k, 0), single_buffer=weights_resident),   # W2
        _spec((1, d_model), lambda i, k: (0, 0), single_buffer=True),                # b2
    ]
    args = [x2, w1, b1_2d, w2, b2_2d]

    if apply_dropout:
        if rng_key is None:
            rng_key = jax.random.PRNGKey(0)
        # TODO(synk): dropout mask is generated host-side with jax.random
        # (Bernoulli keep, 1/(1-p) scale) — matches nn.Dropout semantics but not
        # torch's exact RNG stream; in-kernel pltpu.prng_* is avoided because it
        # has no interpret/CPU lowering.
        keep = jax.random.bernoulli(rng_key, 1.0 - float(drop_prob), (m_pad, hidden))
        scale = jnp.asarray(1.0 / (1.0 - float(drop_prob)), x.dtype)
        mask = keep.astype(x.dtype) * scale
        in_specs.append(pl.BlockSpec((tm, th), lambda i, k: (i, k)))
        args.append(mask)

    # Explicit VMEM budget: double-buffered streaming tiles + resident weights.
    itemsize_x = x.dtype.itemsize
    itemsize_w = w1.dtype.itemsize
    nbuf_w = 1 if weights_resident else 2
    vmem_needed = (
        2 * tm * d_model * itemsize_x                    # x tiles (double buffered)
        + 2 * tm * d_model * itemsize_x                  # out tiles (double buffered)
        + nbuf_w * 2 * d_model * th * itemsize_w         # W1 + W2 slabs
        + nbuf_w * th * itemsize_w + d_model * itemsize_w  # biases
        + tm * d_model * 4                               # f32 accumulator scratch
        + tm * th * 4                                    # h intermediate
    )
    if apply_dropout:
        vmem_needed += 2 * tm * th * itemsize_x
    vmem_limit = max(32 << 20, min(int(vmem_needed * 3 // 2), 128 << 20))

    flops = 4 * m_pad * d_model * hidden
    bytes_accessed = (
        2 * m_pad * d_model * itemsize_x                 # x + out
        + 2 * d_model * hidden * itemsize_w              # W1 + W2
        + (hidden + d_model) * itemsize_w                # biases
    )
    if apply_dropout:
        bytes_accessed += m_pad * hidden * itemsize_x

    kernel = _make_ffn_kernel(apply_dropout)

    out = pl.pallas_call(
        kernel,
        out_shape=jax.ShapeDtypeStruct((m_pad, d_model), x.dtype),
        grid_spec=pltpu.PrefetchScalarGridSpec(
            num_scalar_prefetch=0,
            grid=grid,
            in_specs=in_specs,
            out_specs=pl.BlockSpec((tm, d_model), lambda i, k: (i, 0)),
            scratch_shapes=[pltpu.VMEM((tm, d_model), jnp.float32)],
        ),
        compiler_params=pltpu.CompilerParams(
            dimension_semantics=("parallel", "arbitrary"),
            vmem_limit_bytes=vmem_limit,
        ),
        cost_estimate=pl.CostEstimate(
            flops=flops, transcendentals=0, bytes_accessed=bytes_accessed
        ),
    )(*args)

    if padded:
        out = out[:m]
    return out.reshape(orig_shape)
    # NOTE: the module's `print('Positionwise feed forward ')` side effect is omitted.


def _reference(x, w1, b1, w2, b2):
    hi = jax.lax.Precision.HIGHEST
    h = jnp.maximum(jnp.einsum("...d,dh->...h", x, w1, precision=hi) + b1, 0.0)
    return jnp.einsum("...h,hd->...d", h, w2, precision=hi) + b2


if __name__ == "__main__":
    batch, seq, d_model, hidden = 2, 8, 128, 256   # lane-dense feature dims

    key = jax.random.PRNGKey(0)
    kx, k1, kb1, k2, kb2, kdrop = jax.random.split(key, 6)
    x = jax.random.normal(kx, (batch, seq, d_model), jnp.float32)
    w1 = jax.random.normal(k1, (d_model, hidden), jnp.float32) * 0.05
    b1 = jax.random.normal(kb1, (hidden,), jnp.float32) * 0.05
    w2 = jax.random.normal(k2, (hidden, d_model), jnp.float32) * 0.05
    b2 = jax.random.normal(kb2, (d_model,), jnp.float32) * 0.05

    # Eval mode (dropout = identity): check against a high-precision reference.
    y = positionwise_feed_forward(x, w1, b1, w2, b2, drop_prob=0.1, training=False)
    y = jax.block_until_ready(y)
    ref = _reference(x, w1, b1, w2, b2)
    assert y.shape == x.shape and y.dtype == x.dtype
    assert jnp.allclose(y, ref, atol=2e-2, rtol=2e-2), "mismatch vs reference (eval mode)"

    # Training mode (dropout active): exercise the masked path, sanity-check output.
    y_tr = positionwise_feed_forward(
        x, w1, b1, w2, b2, drop_prob=0.1, training=True, rng_key=kdrop
    )
    y_tr = jax.block_until_ready(y_tr)
    assert y_tr.shape == x.shape
    assert bool(jnp.all(jnp.isfinite(y_tr)))

    print("KERNEL_OK")
</pallas_src>

<mosaic_0001>
module attributes {stable_mosaic.version = 11 : i64} {
  func.func @kernel(%arg0: i32, %arg1: i32, %arg2: memref<16x128xf32, #tpu.memory_space<vmem>>, %arg3: memref<128x256xf32, #tpu.memory_space<vmem>>, %arg4: memref<1x256xf32, #tpu.memory_space<vmem>>, %arg5: memref<256x128xf32, #tpu.memory_space<vmem>>, %arg6: memref<1x128xf32, #tpu.memory_space<vmem>>, %arg7: memref<16x128xf32, #tpu.memory_space<vmem>>, %arg8: memref<16x128xf32, #tpu.memory_space<vmem>>) attributes {dimension_semantics = [#tpu.dimension_semantics<parallel>, #tpu.dimension_semantics<arbitrary>], iteration_bounds = array<i64: 1, 1>, scalar_prefetch = 0 : i64, scratch_operands = 1 : i64, tpu.core_type = #tpu.core_type<tc>, window_params = [{transform_indices = @transform_0, window_bounds = array<i64: 16, 128>}, {pipeline_mode = #tpu.pipeline_mode<synchronous>, transform_indices = @transform_1, window_bounds = array<i64: 128, 256>}, {pipeline_mode = #tpu.pipeline_mode<synchronous>, transform_indices = @transform_2, window_bounds = array<i64: 1, 256>}, {pipeline_mode = #tpu.pipeline_mode<synchronous>, transform_indices = @transform_3, window_bounds = array<i64: 256, 128>}, {pipeline_mode = #tpu.pipeline_mode<synchronous>, transform_indices = @transform_4, window_bounds = array<i64: 1, 128>}, {transform_indices = @transform_5, window_bounds = array<i64: 16, 128>}]} {
    %c0_i32 = arith.constant 0 : i32
    %0 = arith.cmpi eq, %arg1, %c0_i32 : i32
    %1 = arith.extui %0 : i1 to i32
    %c0_i32_0 = arith.constant 0 : i32
    %2 = arith.cmpi ne, %1, %c0_i32_0 : i32
    scf.if %2 {
      %cst_16 = arith.constant 0.000000e+00 : f32
      %19 = vector.broadcast %cst_16 : f32 to vector<16x128xf32>
      %c0_17 = arith.constant 0 : index
      %c0_18 = arith.constant 0 : index
      %20 = vector.load %arg8[%c0_17, %c0_18] : memref<16x128xf32, #tpu.memory_space<vmem>>, vector<16x128xf32>
      tpu.vector_store %arg8[%c0_17, %c0_18], %19 {strides = array<i32>} : memref<16x128xf32, #tpu.memory_space<vmem>>, vector<16x128xf32>,
    } else {
    }
    %c0 = arith.constant 0 : index
    %c0_1 = arith.constant 0 : index
    %3 = vector.load %arg2[%c0, %c0_1] : memref<16x128xf32, #tpu.memory_space<vmem>>, vector<16x128xf32>
    %c0_2 = arith.constant 0 : index
    %c0_3 = arith.constant 0 : index
    %4 = vector.load %arg3[%c0_2, %c0_3] : memref<128x256xf32, #tpu.memory_space<vmem>>, vector<128x256xf32>
    %cst = arith.constant dense<0.000000e+00> : vector<16x256xf32>
    %5 = tpu.matmul %3, %4, %cst {dimension_numbers = #tpu.dot_dimension_numbers<[1], [0], [0], [1], [0, 0, 1, 1], [], []>} : vector<16x128xf32>, vector<128x256xf32>, vector<16x256xf32> -> vector<16x256xf32>
    %c0_4 = arith.constant 0 : index
    %c0_5 = arith.constant 0 : index
    %6 = vector.load %arg4[%c0_4, %c0_5] : memref<1x256xf32, #tpu.memory_space<vmem>>, vector<1x256xf32>
    %7 = vector.broadcast %6 : vector<1x256xf32> to vector<16x256xf32>
    %8 = arith.addf %5, %7 : vector<16x256xf32>
    %cst_6 = arith.constant 0.000000e+00 : f32
    %9 = vector.broadcast %cst_6 : f32 to vector<16x256xf32>
    %10 = arith.maximumf %8, %9 : vector<16x256xf32>
    %c0_7 = arith.constant 0 : index
    %c0_8 = arith.constant 0 : index
    %11 = vector.load %arg8[%c0_7, %c0_8] : memref<16x128xf32, #tpu.memory_space<vmem>>, vector<16x128xf32>
    %c0_9 = arith.constant 0 : index
    %c0_10 = arith.constant 0 : index
    %12 = vector.load %arg5[%c0_9, %c0_10] : memref<256x128xf32, #tpu.memory_space<vmem>>, vector<256x128xf32>
    %cst_11 = arith.constant dense<0.000000e+00> : vector<16x128xf32>
    %13 = tpu.matmul %10, %12, %cst_11 {dimension_numbers = #tpu.dot_dimension_numbers<[1], [0], [0], [1], [0, 0, 1, 1], [], []>} : vector<16x256xf32>, vector<256x128xf32>, vector<16x128xf32> -> vector<16x128xf32>
    %14 = arith.addf %11, %13 : vector<16x128xf32>
    %c0_12 = arith.constant 0 : index
    %c0_13 = arith.constant 0 : index
    %15 = vector.load %arg8[%c0_12, %c0_13] : memref<16x128xf32, #tpu.memory_space<vmem>>, vector<16x128xf32>
    tpu.vector_store %arg8[%c0_12, %c0_13], %14 {strides = array<i32>} : memref<16x128xf32, #tpu.memory_space<vmem>>, vector<16x128xf32>,
    %c0_i32_14 = arith.constant 0 : i32
    %16 = arith.cmpi eq, %arg1, %c0_i32_14 : i32
    %17 = arith.extui %16 : i1 to i32
    %c0_i32_15 = arith.constant 0 : i32
    %18 = arith.cmpi ne, %17, %c0_i32_15 : i32
    scf.if %18 {
      %c0_16 = arith.constant 0 : index
      %c0_17 = arith.constant 0 : index
      %19 = vector.load %arg8[%c0_16, %c0_17] : memref<16x128xf32, #tpu.memory_space<vmem>>, vector<16x128xf32>
      %c0_18 = arith.constant 0 : index
      %c0_19 = arith.constant 0 : index
      %20 = vector.load %arg6[%c0_18, %c0_19] : memref<1x128xf32, #tpu.memory_space<vmem>>, vector<1x128xf32>
      %21 = vector.broadcast %20 : vector<1x128xf32> to vector<16x128xf32>
      %22 = arith.addf %19, %21 : vector<16x128xf32>
      %c0_20 = arith.constant 0 : index
      %c0_21 = arith.constant 0 : index
      %23 = vector.load %arg7[%c0_20, %c0_21] : memref<16x128xf32, #tpu.memory_space<vmem>>, vector<16x128xf32>
      tpu.vector_store %arg7[%c0_20, %c0_21], %22 {strides = array<i32>} : memref<16x128xf32, #tpu.memory_space<vmem>>, vector<16x128xf32>,
    } else {
    }
    return
  }
  func.func @transform_0(%arg0: i32, %arg1: i32) -> (i32, i32) {
    %c0_i32 = arith.constant 0 : i32
    %c0_i32_0 = arith.constant 0 : i32
    return %arg0, %c0_i32 : i32, i32
  }
  func.func @transform_1(%arg0: i32, %arg1: i32) -> (i32, i32) {
    %c0_i32 = arith.constant 0 : i32
    %c0_i32_0 = arith.constant 0 : i32
    return %c0_i32, %arg1 : i32, i32
  }
  func.func @transform_2(%arg0: i32, %arg1: i32) -> (i32, i32) {
    %c0_i32 = arith.constant 0 : i32
    %c0_i32_0 = arith.constant 0 : i32
    return %c0_i32, %arg1 : i32, i32
  }
  func.func @transform_3(%arg0: i32, %arg1: i32) -> (i32, i32) {
    %c0_i32 = arith.constant 0 : i32
    %c0_i32_0 = arith.constant 0 : i32
    return %arg1, %c0_i32 : i32, i32
  }
  func.func @transform_4(%arg0: i32, %arg1: i32) -> (i32, i32) {
    %c0_i32 = arith.constant 0 : i32
    %c0_i32_0 = arith.constant 0 : i32
    %c0_i32_1 = arith.constant 0 : i32
    return %c0_i32, %c0_i32_0 : i32, i32
  }
  func.func @transform_5(%arg0: i32, %arg1: i32) -> (i32, i32) {
    %c0_i32 = arith.constant 0 : i32
    %c0_i32_0 = arith.constant 0 : i32
    return %arg0, %c0_i32 : i32, i32
  }
}

</mosaic_0001>

<llo_original>
// kernel: tpu_custom_call.1
$region0: #{tpu_custom_call.1}
  #allocation0 [shape = 'u32[]', space=smem, size = 0x4, offset = 0x4, fixed_abs, tag = 'smem constant byte address 0x4 - core index']
  #allocation1 [shape = 'u32[144,128]{1,0:T(1,128)}', space=vmem, size = 0x12000, scoped, tag = 'internal scratch']
  #allocation2 [shape = 'f32[16,128]{1,0:T(8,128)}', space=vmem, size = 0x2000, scoped, tag = 'scratch operand']
  %s0 = inlined_call_operand.hbm [shape: f32[16,128], index: 0, kind: input, shape index: {}]
  %s1 = inlined_call_operand.hbm [shape: f32[128,256], index: 1, kind: input, shape index: {}]
  %s2 = inlined_call_operand.vmem [shape: f32[1,256], index: 2, kind: input, shape index: {}]
  %s3 = inlined_call_operand.hbm [shape: f32[256,128], index: 3, kind: input, shape index: {}]
  %s4 = inlined_call_operand.vmem [shape: f32[1,128], index: 4, kind: input, shape index: {}]
  %s5 = inlined_call_operand.hbm [shape: f32[16,128], index: 5, kind: output, shape index: {}]
  %s6 = sld [smem:[#allocation0]]
  $region50: #{tpu_custom_call.1} parent=0
    _
  %s8 = ssub.s32 1, %s6
  %s9 = scalar_select 0, %s8, %s6
  $region1: #{tpu_custom_call.1} parent=0
    #allocation3 [shape = 'u8[8192]{0}', space=vmem, size = 0x2000, scoped, tag = 'input window, operand 0, single buffered']
    #allocation4 [shape = 's32[1]{0}', space=sflag, size = 0x4, scoped, tag = 'scoped memory for tpu_custom_call.1']
    #allocation5 [shape = 's32[1]{0}', space=sflag, size = 0x4, scoped, tag = 'scoped memory for tpu_custom_call.1']
    #allocation6 [shape = 'u8[131072]{0}', space=vmem, size = 0x20000, scoped, tag = 'input window, operand 1, single buffered']
    #allocation7 [shape = 's32[1]{0}', space=sflag, size = 0x4, scoped, tag = 'scoped memory for tpu_custom_call.1']
    #allocation8 [shape = 'u8[131072]{0}', space=vmem, size = 0x20000, scoped, tag = 'input window, operand 3, single buffered']
    #allocation9 [shape = 'u8[8192]{0}', space=vmem, size = 0x2000, scoped, tag = 'output window, operand 0, single buffered']
    %10 = vsyncpa [#allocation4], 0
    %11 = vsyncpa [#allocation7], 0
    %12 = vsyncpa [#allocation5], 0
    // Predicated region
    $region2: #{tpu_custom_call.1} parent=1 // pred_check
      _
    $region3: #{tpu_custom_call.1} parent=1 // pred_check_branch
      %14 = sbr.rel (0) target = $region5
    $region4: #{tpu_custom_call.1} parent=1 // pred_region
      %s16 = ssub.s32 256, 256
      %17 = vsyncadd [#allocation4], %s16
      %s18 = sshll.u32 [#allocation3], 4
      %s19 = int_to_ptr.vmem [resolvable:$true] %s18
      %24 = dma.hbm_to_vmem [thread:$0]  %s0, 256, %s19, [#allocation4], 128, 128, 8
    $region5: #{tpu_custom_call.1} parent=1 // pred_fallthru
      _
    // Predicated region
    $region6: #{tpu_custom_call.1} parent=1 // pred_check
      _
    $region7: #{tpu_custom_call.1} parent=1 // pred_check_branch
      %26 = sbr.rel (0) target = $region9
    $region8: #{tpu_custom_call.1} parent=1 // pred_region
      %s28 = ssub.s32 4096, 4096
      %29 = vsyncadd [#allocation7], %s28
      %s30 = sshll.u32 [#allocation6], 4
      %s31 = int_to_ptr.vmem [resolvable:$true] %s30
      %36 = dma.hbm_to_vmem [thread:$0]  %s1, 4096, %s31, [#allocation7], 256, 256, 16
    $region9: #{tpu_custom_call.1} parent=1 // pred_fallthru
      _
    // Predicated region
    $region10: #{tpu_custom_call.1} parent=1 // pred_check
      _
    $region11: #{tpu_custom_call.1} parent=1 // pred_check_branch
      %38 = sbr.rel (0) target = $region13
    $region12: #{tpu_custom_call.1} parent=1 // pred_region
      _
    $region13: #{tpu_custom_call.1} parent=1 // pred_fallthru
      _
    // Predicated region
    $region14: #{tpu_custom_call.1} parent=1 // pred_check
      _
    $region15: #{tpu_custom_call.1} parent=1 // pred_check_branch
      %40 = sbr.rel (0) target = $region17
    $region16: #{tpu_custom_call.1} parent=1 // pred_region
      %s42 = ssub.s32 4096, 4096
      %43 = vsyncadd [#allocation7], %s42
      %s44 = sshll.u32 [#allocation8], 4
      %s45 = int_to_ptr.vmem [resolvable:$true] %s44
      %50 = dma.hbm_to_vmem [thread:$0]  %s3, 4096, %s45, [#allocation7], 128, 128, 8
    $region17: #{tpu_custom_call.1} parent=1 // pred_fallthru
      _
    // Predicated region
    $region18: #{tpu_custom_call.1} parent=1 // pred_check
      _
    $region19: #{tpu_custom_call.1} parent=1 // pred_check_branch
      %52 = sbr.rel (0) target = $region21
    $region20: #{tpu_custom_call.1} parent=1 // pred_region
      _
    $region21: #{tpu_custom_call.1} parent=1 // pred_fallthru
      _
    // Predicated region
    $region22: #{tpu_custom_call.1} parent=1 // pred_check
      _
    $region23: #{tpu_custom_call.1} parent=1 // pred_check_branch
      %54 = sbr.rel (0) target = $region25
    $region24: #{tpu_custom_call.1} parent=1 // pred_region
      %55 = dma.done [#allocation4], 256
    $region25: #{tpu_custom_call.1} parent=1 // pred_fallthru
      _
    // Predicated region
    $region26: #{tpu_custom_call.1} parent=1 // pred_check
      _
    $region27: #{tpu_custom_call.1} parent=1 // pred_check_branch
      %57 = sbr.rel (0) target = $region29
    $region28: #{tpu_custom_call.1} parent=1 // pred_region
      %58 = dma.done [#allocation7], 4096
    $region29: #{tpu_custom_call.1} parent=1 // pred_fallthru
      _
    // Predicated region
    $region30: #{tpu_custom_call.1} parent=1 // pred_check
      _
    $region31: #{tpu_custom_call.1} parent=1 // pred_check_branch
      %60 = sbr.rel (0) target = $region33
    $region32: #{tpu_custom_call.1} parent=1 // pred_region
      %61 = dma.done [#allocation7], 4096
    $region33: #{tpu_custom_call.1} parent=1 // pred_fallthru
      _
    %p62 = scmp.eq.s32.totalorder 0, 0
    // Predicated region
    $region34: #{tpu_custom_call.1} parent=1 // pred_check
      %p63 = pneg %p62
    $region35: #{tpu_custom_call.1} parent=1 // pred_check_branch
      %65 = sbr.rel (%p63) target = $region37
    $region36: #{tpu_custom_call.1} parent=1 // pred_region
      %66 = vst [vmem:[#allocation2] sm:$0xff] 0.0
      %67 = vst [vmem:[#allocation2 + $0x8] sm:$0xff] 0.0
    $region37: #{tpu_custom_call.1} parent=1 // pred_fallthru
      _
    %v68 = vld [vmem:[#allocation3] sm:$0xff]
    %v69 = vld [vmem:[#allocation3 + $0x8] sm:$0xff]
    %v70 = vld [vmem:[#allocation6] sm:$0xff]
    %v71 = vld [vmem:[#allocation6 + $0x8] sm:$0xff]
    %v72 = vld [vmem:[#allocation6 + $0x10] sm:$0xff]
    %v73 = vld [vmem:[#allocation6 + $0x18] sm:$0xff]
    %v74 = vld [vmem:[#allocation6 + $0x20] sm:$0xff]
    %v75 = vld [vmem:[#allocation6 + $0x28] sm:$0xff]
    %v76 = vld [vmem:[#allocation6 + $0x30] sm:$0xff]
    %v77 = vld [vmem:[#allocation6 + $0x38] sm:$0xff]
    %v78 = vld [vmem:[#allocation6 + $0x40] sm:$0xff]
    %v79 = vld [vmem:[#allocation6 + $0x48] sm:$0xff]
    %v80 = vld [vmem:[#allocation6 + $0x50] sm:$0xff]
    %v81 = vld [vmem:[#allocation6 + $0x58] sm:$0xff]
    %v82 = vld [vmem:[#allocation6 + $0x60] sm:$0xff]
    %v83 = vld [vmem:[#allocation6 + $0x68] sm:$0xff]
    %v84 = vld [vmem:[#allocation6 + $0x70] sm:$0xff]
    %v85 = vld [vmem:[#allocation6 + $0x78] sm:$0xff]
    %v86 = vld [vmem:[#allocation6 + $0x80] sm:$0xff]
    %v87 = vld [vmem:[#allocation6 + $0x88] sm:$0xff]
    %v88 = vld [vmem:[#allocation6 + $0x90] sm:$0xff]
    %v89 = vld [vmem:[#allocation6 + $0x98] sm:$0xff]
    %v90 = vld [vmem:[#allocation6 + $0xa0] sm:$0xff]
    %v91 = vld [vmem:[#allocation6 + $0xa8] sm:$0xff]
    %v92 = vld [vmem:[#allocation6 + $0xb0] sm:$0xff]
    %v93 = vld [vmem:[#allocation6 + $0xb8] sm:$0xff]
    %v94 = vld [vmem:[#allocation6 + $0xc0] sm:$0xff]
    %v95 = vld [vmem:[#allocation6 + $0xc8] sm:$0xff]
    %v96 = vld [vmem:[#allocation6 + $0xd0] sm:$0xff]
    %v97 = vld [vmem:[#allocation6 + $0xd8] sm:$0xff]
    %v98 = vld [vmem:[#allocation6 + $0xe0] sm:$0xff]
    %v99 = vld [vmem:[#allocation6 + $0xe8] sm:$0xff]
    %v100 = vld [vmem:[#allocation6 + $0xf0] sm:$0xff]
    %v101 = vld [vmem:[#allocation6 + $0xf8] sm:$0xff]
    %v102 = vld [vmem:[%s2] sm:$0x3]
    %v104 = vlaneseq
    %v105 = vshrl.u32 %v104, 7
    %v106 = vsub.s32 0, %v105
    %v107 = vrot.slane %v102, %v106
    %v108 = vlaneseq
    %v109 = vshrl.u32 %v108, 7
    %v110 = vsub.s32 1, %v109
    %v111 = vrot.slane %v102, %v110
    %114 = vmatprep.subr.mxu0 %v71
    %115 = vmatpush1.msra.mxu0 %v70
    %116 = vmatprep.subr.mxu0 %v73
    %117 = vmatpush1.msra.mxu0 %v72
    %118 = vmatprep.subr.mxu0 %v75
    %119 = vmatpush1.msra.mxu0 %v74
    %120 = vmatprep.subr.mxu0 %v77
    %121 = vmatpush1.msra.mxu0 %v76
    %122 = vmatprep.subr.mxu0 %v79
    %123 = vmatpush1.msra.mxu0 %v78
    %124 = vmatprep.subr.mxu0 %v81
    %125 = vmatpush1.msra.mxu0 %v80
    %126 = vmatprep.subr.mxu0 %v83
    %127 = vmatpush1.msra.mxu0 %v82
    %128 = vmatprep.subr.mxu0 %v85
    %129 = vmatpush1.msra.mxu0 %v84
    %130 = vmatprep.subr.mxu0 %v87
    %131 = vmatpush1.msra.mxu0 %v86
    %132 = vmatprep.subr.mxu0 %v89
    %133 = vmatpush1.msra.mxu0 %v88
    %134 = vmatprep.subr.mxu0 %v91
    %135 = vmatpush1.msra.mxu0 %v90
    %136 = vmatprep.subr.mxu0 %v93
    %137 = vmatpush1.msra.mxu0 %v92
    %138 = vmatprep.subr.mxu0 %v95
    %139 = vmatpush1.msra.mxu0 %v94
    %140 = vmatprep.subr.mxu0 %v97
    %141 = vmatpush1.msra.mxu0 %v96
    %142 = vmatprep.subr.mxu0 %v99
    %143 = vmatpush1.msra.mxu0 %v98
    %144 = vmatprep.subr.mxu0 %v101
    %145 = vmatpush1.msra.mxu0 %v100
    %146 = vmatprep.subr.mxu0 0.0
    %147 = vmatpush1.msra.mxu0 0.0
    %148 = vmatprep.subr.mxu0 0.0
    %149 = vmatpush1.msra.mxu0 0.0
    %150 = vmatprep.subr.mxu0 0.0
    %151 = vmatpush1.msra.mxu0 0.0
    %152 = vmatprep.subr.mxu0 0.0
    %153 = vmatpush1.msra.mxu0 0.0
    %154 = vmatprep.subr.mxu0 0.0
    %155 = vmatpush1.msra.mxu0 0.0
    %156 = vmatprep.subr.mxu0 0.0
    %157 = vmatpush1.msra.mxu0 0.0
    %158 = vmatprep.subr.mxu0 0.0
    %159 = vmatpush1.msra.mxu0 0.0
    %160 = vmatprep.subr.mxu0 0.0
    %161 = vmatpush1.msra.mxu0 0.0
    %162 = vmatprep.subr.mxu0 0.0
    %163 = vmatpush1.msra.mxu0 0.0
    %164 = vmatprep.subr.mxu0 0.0
    %165 = vmatpush1.msra.mxu0 0.0
    %166 = vmatprep.subr.mxu0 0.0
    %167 = vmatpush1.msra.mxu0 0.0
    %168 = vmatprep.subr.mxu0 0.0
    %169 = vmatpush1.msra.mxu0 0.0
    %170 = vmatprep.subr.mxu0 0.0
    %171 = vmatpush1.msra.mxu0 0.0
    %172 = vmatprep.subr.mxu0 0.0
    %173 = vmatpush1.msra.mxu0 0.0
    %174 = vmatprep.subr.mxu0 0.0
    %175 = vmatpush1.msra.mxu0 0.0
    %176 = vmatprep.subr.mxu0 0.0
    %177 = vmatpush1.msra.mxu0 0.0
    %178 = vmatprep.mubr.f32.mxu0 0.0
    %179 = vmatmul.mubr.f32.gmra.mrb[0].mxu0 %v68
    %v180 = vpop.f32.mrb[0].mxu0
    %v181 = vadd.f32 %v107, %v180
    %v182 = vpop.f32.mrb[0].mxu0
    %v183 = vadd.f32 %v111, %v182
    %184 = vmatprep.mubr.f32.mxu0 0.0
    %185 = vmatmul.mubr.f32.gmra.mrb[0].mxu0 %v69
    %v186 = vpop.f32.mrb[0].mxu0
    %v187 = vadd.f32 %v107, %v186
    %v188 = vpop.f32.mrb[0].mxu0
    %v189 = vadd.f32 %v111, %v188
    %190 = vdwg.mxu0
    %v191 = vmax.f32 %v181, 0.0
    %v192 = vmax.f32 %v183, 0.0
    %v193 = vmax.f32 %v187, 0.0
    %v194 = vmax.f32 %v189, 0.0
    %v195 = vld [vmem:[#allocation2] sm:$0xff]
    %v196 = vld [vmem:[#allocation2 + $0x8] sm:$0xff]
    %v197 = vld [vmem:[#allocation8] sm:$0xff]
    %v198 = vld [vmem:[#allocation8 + $0x8] sm:$0xff]
    %v199 = vld [vmem:[#allocation8 + $0x10] sm:$0xff]
    %v200 = vld [vmem:[#allocation8 + $0x18] sm:$0xff]
    %v201 = vld [vmem:[#allocation8 + $0x20] sm:$0xff]
    %v202 = vld [vmem:[#allocation8 + $0x28] sm:$0xff]
    %v203 = vld [vmem:[#allocation8 + $0x30] sm:$0xff]
    %v204 = vld [vmem:[#allocation8 + $0x38] sm:$0xff]
    %v205 = vld [vmem:[#allocation8 + $0x40] sm:$0xff]
    %v206 = vld [vmem:[#allocation8 + $0x48] sm:$0xff]
    %v207 = vld [vmem:[#allocation8 + $0x50] sm:$0xff]
    %v208 = vld [vmem:[#allocation8 + $0x58] sm:$0xff]
    %v209 = vld [vmem:[#allocation8 + $0x60] sm:$0xff]
    %v210 = vld [vmem:[#allocation8 + $0x68] sm:$0xff]
    %v211 = vld [vmem:[#allocation8 + $0x70] sm:$0xff]
    %v212 = vld [vmem:[#allocation8 + $0x78] sm:$0xff]
    %v213 = vld [vmem:[#allocation8 + $0x80] sm:$0xff]
    %v214 = vld [vmem:[#allocation8 + $0x88] sm:$0xff]
    %v215 = vld [vmem:[#allocation8 + $0x90] sm:$0xff]
    %v216 = vld [vmem:[#allocation8 + $0x98] sm:$0xff]
    %v217 = vld [vmem:[#allocation8 + $0xa0] sm:$0xff]
    %v218 = vld [vmem:[#allocation8 + $0xa8] sm:$0xff]
    %v219 = vld [vmem:[#allocation8 + $0xb0] sm:$0xff]
    %v220 = vld [vmem:[#allocation8 + $0xb8] sm:$0xff]
    %v221 = vld [vmem:[#allocation8 + $0xc0] sm:$0xff]
    %v222 = vld [vmem:[#allocation8 + $0xc8] sm:$0xff]
    %v223 = vld [vmem:[#allocation8 + $0xd0] sm:$0xff]
    %v224 = vld [vmem:[#allocation8 + $0xd8] sm:$0xff]
    %v225 = vld [vmem:[#allocation8 + $0xe0] sm:$0xff]
    %v226 = vld [vmem:[#allocation8 + $0xe8] sm:$0xff]
    %v227 = vld [vmem:[#allocation8 + $0xf0] sm:$0xff]
    %v228 = vld [vmem:[#allocation8 + $0xf8] sm:$0xff]
    %229 = vmatprep.subr.mxu0 0.0
    %230 = vmatpush1.msra.mxu0 %v197
    %231 = vmatprep.subr.mxu0 0.0
    %232 = vmatpush1.msra.mxu0 %v198
    %233 = vmatprep.subr.mxu0 0.0
    %234 = vmatpush1.msra.mxu0 %v199
    %235 = vmatprep.subr.mxu0 0.0
    %236 = vmatpush1.msra.mxu0 %v200
    %237 = vmatprep.subr.mxu0 0.0
    %238 = vmatpush1.msra.mxu0 %v201
    %239 = vmatprep.subr.mxu0 0.0
    %240 = vmatpush1.msra.mxu0 %v202
    %241 = vmatprep.subr.mxu0 0.0
    %242 = vmatpush1.msra.mxu0 %v203
    %243 = vmatprep.subr.mxu0 0.0
    %244 = vmatpush1.msra.mxu0 %v204
    %245 = vmatprep.subr.mxu0 0.0
    %246 = vmatpush1.msra.mxu0 %v205
    %247 = vmatprep.subr.mxu0 0.0
    %248 = vmatpush1.msra.mxu0 %v206
    %249 = vmatprep.subr.mxu0 0.0
    %250 = vmatpush1.msra.mxu0 %v207
    %251 = vmatprep.subr.mxu0 0.0
    %252 = vmatpush1.msra.mxu0 %v208
    %253 = vmatprep.subr.mxu0 0.0
    %254 = vmatpush1.msra.mxu0 %v209
    %255 = vmatprep.subr.mxu0 0.0
    %256 = vmatpush1.msra.mxu0 %v210
    %257 = vmatprep.subr.mxu0 0.0
    %258 = vmatpush1.msra.mxu0 %v211
    %259 = vmatprep.subr.mxu0 0.0
    %260 = vmatpush1.msra.mxu0 %v212
    %261 = vmatprep.subr.mxu0 0.0
    %262 = vmatpush1.msra.mxu0 %v213
    %263 = vmatprep.subr.mxu0 0.0
    %264 = vmatpush1.msra.mxu0 %v214
    %265 = vmatprep.subr.mxu0 0.0
    %266 = vmatpush1.msra.mxu0 %v215
    %267 = vmatprep.subr.mxu0 0.0
    %268 = vmatpush1.msra.mxu0 %v216
    %269 = vmatprep.subr.mxu0 0.0
    %270 = vmatpush1.msra.mxu0 %v217
    %271 = vmatprep.subr.mxu0 0.0
    %272 = vmatpush1.msra.mxu0 %v218
    %273 = vmatprep.subr.mxu0 0.0
    %274 = vmatpush1.msra.mxu0 %v219
    %275 = vmatprep.subr.mxu0 0.0
    %276 = vmatpush1.msra.mxu0 %v220
    %277 = vmatprep.subr.mxu0 0.0
    %278 = vmatpush1.msra.mxu0 %v221
    %279 = vmatprep.subr.mxu0 0.0
    %280 = vmatpush1.msra.mxu0 %v222
    %281 = vmatprep.subr.mxu0 0.0
    %282 = vmatpush1.msra.mxu0 %v223
    %283 = vmatprep.subr.mxu0 0.0
    %284 = vmatpush1.msra.mxu0 %v224
    %285 = vmatprep.subr.mxu0 0.0
    %286 = vmatpush1.msra.mxu0 %v225
    %287 = vmatprep.subr.mxu0 0.0
    %288 = vmatpush1.msra.mxu0 %v226
    %289 = vmatprep.subr.mxu0 0.0
    %290 = vmatpush1.msra.mxu0 %v227
    %291 = vmatprep.subr.mxu0 0.0
    %292 = vmatpush1.msra.mxu0 %v228
    %293 = vmatprep.mubr.f32.mxu0 %v192
    %294 = vmatmul.mubr.f32.gmra.mrb[0].mxu0 %v191
    %v295 = vpop.f32.mrb[0].mxu0
    %v296 = vadd.f32 0.0, %v295
    %v297 = vpop.f32.mrb[0].mxu0
    %298 = vmatprep.mubr.f32.mxu0 %v194
    %299 = vmatmul.mubr.f32.gmra.mrb[0].mxu0 %v193
    %v300 = vpop.f32.mrb[0].mxu0
    %v301 = vadd.f32 0.0, %v300
    %v302 = vpop.f32.mrb[0].mxu0
    %303 = vdwg.mxu0
    %v304 = vadd.f32 %v195, %v296
    %v305 = vadd.f32 %v196, %v301
    %306 = vst [vmem:[#allocation2] sm:$0xff] %v304
    %307 = vst [vmem:[#allocation2 + $0x8] sm:$0xff] %v305
    // Predicated region
    $region38: #{tpu_custom_call.1} parent=1 // pred_check
      %p308 = pneg %p62
    $region39: #{tpu_custom_call.1} parent=1 // pred_check_branch
      %310 = sbr.rel (%p308) target = $region41
    $region40: #{tpu_custom_call.1} parent=1 // pred_region
      %v311 = vld [vmem:[#allocation2] sm:$0xff]
      %v312 = vld [vmem:[#allocation2 + $0x8] sm:$0xff]
      %v313 = vld [vmem:[%s4] sm:$0x1]
      %v315 = vlaneseq
      %v316 = vshrl.u32 %v315, 7
      %v317 = vsub.s32 0, %v316
      %v318 = vrot.slane %v313, %v317
      %v320 = vadd.f32 %v311, %v318
      %v321 = vadd.f32 %v312, %v318
      %322 = vst [vmem:[#allocation9] sm:$0xff] %v320
      %323 = vst [vmem:[#allocation9 + $0x8] sm:$0xff] %v321
    $region41: #{tpu_custom_call.1} parent=1 // pred_fallthru
      _
    // Predicated region
    $region42: #{tpu_custom_call.1} parent=1 // pred_check
      _
    $region43: #{tpu_custom_call.1} parent=1 // pred_check_branch
      %325 = sbr.rel (0) target = $region45
    $region44: #{tpu_custom_call.1} parent=1 // pred_region
      %s327 = ssub.s32 256, 256
      %328 = vsyncadd [#allocation5], %s327
      %s329 = sshll.u32 [#allocation9], 4
      %s330 = int_to_ptr.vmem [resolvable:$true] %s329
      %335 = dma.vmem_to_hbm [thread:$0]  %s330, 256, %s5, [#allocation5], 128, 128, 8
    $region45: #{tpu_custom_call.1} parent=1 // pred_fallthru
      _
    // Predicated region
    $region46: #{tpu_custom_call.1} parent=1 // pred_check
      _
    $region47: #{tpu_custom_call.1} parent=1 // pred_check_branch
      %337 = sbr.rel (0) target = $region49
    $region48: #{tpu_custom_call.1} parent=1 // pred_region
      %338 = dma.done [#allocation5], 256
    $region49: #{tpu_custom_call.1} parent=1 // pred_fallthru
      _
    %339 = vsyncpa [#allocation4], 1
    %340 = vsyncpa [#allocation7], 1
    %341 = vsyncpa [#allocation5], 1

</llo_original>
